<compile_context>
chip_gen: v7x
topology: tpu7x:2x2x1
jax: 0.10.0
libtpu: 0.0.40
codegen_flags: <defaults>
</compile_context>

<pallas_src>
import functools

import jax
import jax.numpy as jnp
from jax.experimental import pallas as pl
from jax.experimental.pallas import tpu as pltpu


def _round_up(x, m):
    return (x + m - 1) // m * m


# ---------------------------------------------------------------------------
# Kernel: one grid step = one batch tile.
#   fv  = x @ W1 + b1          (W1 already (in, hidden_p))
#   out = relu(fv) @ W2 + b2   (W2 already (hidden_p, classes_p))
# Both matmuls are canonical (M,K)x(K,N) with f32 MXU accumulation.
# ---------------------------------------------------------------------------
def _mlp_kernel(x_ref, w1_ref, b1_ref, w2_ref, b2_ref, out_ref, fv_ref):
    fv = jnp.dot(x_ref[...], w1_ref[...], preferred_element_type=jnp.float32)
    fv = fv + b1_ref[...]                      # (1, hidden_p) broadcasts over rows
    fv_ref[...] = fv.astype(fv_ref.dtype)

    # Cast hidden back to the weight dtype so a bf16 compute path keeps both
    # MXU operands bf16 (fast path); accumulation stays f32.
    h = jnp.maximum(fv, 0.0).astype(w2_ref.dtype)
    out = jnp.dot(h, w2_ref[...], preferred_element_type=jnp.float32)
    out = out + b2_ref[...]
    out_ref[...] = out.astype(out_ref.dtype)


def prepare_params(w1, b1, w2, b2, *, compute_dtype=None, lane_multiple=128):
    """One-time weight prep -- run at init, NOT per forward call.

    Takes PyTorch nn.Linear layouts:
      w1: (hidden, in_size)   b1: (hidden,)
      w2: (classes, hidden)   b2: (classes,)
    Returns (w1_t, b1_r, w2_t, b2_r, hidden, num_classes) with
      w1_t: (in_size, hidden_p)    transposed + lane-padded (+ cast)
      w2_t: (hidden_p, classes_p)  transposed + lane-padded (+ cast)
      b*_r: (1, *_p) float32       (bias add stays f32)
    lane_multiple=128 matches v5e's MXU; use 256 on v6e/v7x when the layer
    widths land near a 256 boundary.
    """
    hidden, in_size = w1.shape
    num_classes = w2.shape[0]
    hidden_p = _round_up(hidden, lane_multiple)
    classes_p = _round_up(num_classes, lane_multiple)

    wdt = compute_dtype if compute_dtype is not None else w1.dtype
    w1_t = jnp.zeros((in_size, hidden_p), wdt).at[:, :hidden].set(
        w1.T.astype(wdt))
    w2_t = jnp.zeros((hidden_p, classes_p), wdt).at[:hidden, :num_classes].set(
        w2.T.astype(wdt))
    b1_r = jnp.zeros((1, hidden_p), jnp.float32).at[0, :hidden].set(
        b1.astype(jnp.float32))
    b2_r = jnp.zeros((1, classes_p), jnp.float32).at[0, :num_classes].set(
        b2.astype(jnp.float32))
    return w1_t, b1_r, w2_t, b2_r, hidden, num_classes


@functools.partial(
    jax.jit,
    static_argnames=("hidden", "num_classes", "block_b", "compute_dtype",
                     "fv_dtype"))
def mlp_forward(x, w1_t, b1_r, w2_t, b2_r, *, hidden, num_classes,
                block_b=512, compute_dtype=None, fv_dtype=None):
    """Fused MLP forward on pre-prepared (transposed / padded) weights.

    x: (B, in_size).  Returns (out, fv): (B, num_classes), (B, hidden).
    """
    B, in_size = x.shape
    hidden_p = w1_t.shape[1]
    classes_p = w2_t.shape[1]
    out_dtype = x.dtype
    fv_store_dtype = jnp.dtype(fv_dtype) if fv_dtype is not None \
        else jnp.dtype(out_dtype)

    if compute_dtype is not None:
        x = x.astype(compute_dtype)
    x_dt = jnp.dtype(x.dtype)

    # Sublane granularity: 8 for 32-bit, 16 for bf16 (packed sublanes).
    gran = max(8, 32 // x_dt.itemsize)
    B_pad = _round_up(B, gran)

    # Batch tile: as big as block_b allows, sublane-aligned.
    tm = min(_round_up(block_b, gran), B_pad)
    # Ensure >= 2 grid steps when the batch allows it, so the "parallel" axis
    # can actually shard across v7x's two TensorCores.
    if B_pad >= 2 * gran:
        tm = min(tm, _round_up(pl.cdiv(B, 2), gran))

    # VMEM budgeting: weights are single-buffered (Buffered(1)); streamed
    # x / out / fv tiles are double-buffered by the pipeline.  Cap tm so the
    # total stays within a v7x-safe budget, then set vmem_limit_bytes.
    w_bytes = (w1_t.size * w1_t.dtype.itemsize
               + w2_t.size * w2_t.dtype.itemsize
               + (b1_r.size + b2_r.size) * 4)
    row_bytes = (in_size * x_dt.itemsize
                 + hidden_p * fv_store_dtype.itemsize
                 + classes_p * jnp.dtype(out_dtype).itemsize)
    budget = 44 << 20                     # conservative: fits v7x's 64 MiB VMEM
    avail = max(budget - w_bytes, 2 * gran * row_bytes)
    max_tm = max((avail // (2 * row_bytes)) // gran * gran, gran)
    tm = max(min(tm, max_tm), gran)

    grid = (pl.cdiv(B, tm),)
    vmem_limit = int(1.25 * (w_bytes + 2 * tm * row_bytes)) + (2 << 20)
    vmem_limit = min(max(vmem_limit, 16 << 20), 64 << 20)

    cost = pl.CostEstimate(
        flops=2 * B * (in_size * hidden_p + hidden_p * classes_p),
        transcendentals=0,
        bytes_accessed=int(B * row_bytes + w_bytes),
    )

    out_shapes = (
        jax.ShapeDtypeStruct((B, classes_p), out_dtype),       # out (lane-padded)
        jax.ShapeDtypeStruct((B, hidden_p), fv_store_dtype),   # fv  (lane-padded)
    )

    out_p, fv_p = pl.pallas_call(
        _mlp_kernel,
        out_shape=out_shapes,
        grid_spec=pltpu.PrefetchScalarGridSpec(
            num_scalar_prefetch=0,
            grid=grid,
            in_specs=[
                # Batch-tiled activations: double-buffered / pipelined.
                pl.BlockSpec((tm, in_size), lambda i: (i, 0)),
                # Weights & biases: constant block index -> VMEM-resident,
                # DMA'd once; single buffer (no revisit, no double-buffering).
                pl.BlockSpec((in_size, hidden_p), lambda i: (0, 0),
                             pipeline_mode=pl.Buffered(1)),
                pl.BlockSpec((1, hidden_p), lambda i: (0, 0),
                             pipeline_mode=pl.Buffered(1)),
                pl.BlockSpec((hidden_p, classes_p), lambda i: (0, 0),
                             pipeline_mode=pl.Buffered(1)),
                pl.BlockSpec((1, classes_p), lambda i: (0, 0),
                             pipeline_mode=pl.Buffered(1)),
            ],
            out_specs=[
                pl.BlockSpec((tm, classes_p), lambda i: (i, 0)),
                pl.BlockSpec((tm, hidden_p), lambda i: (i, 0)),
            ],
        ),
        compiler_params=pltpu.CompilerParams(
            dimension_semantics=("parallel",),   # batch tiles are independent
            vmem_limit_bytes=vmem_limit,
        ),
        cost_estimate=cost,
    )(x, w1_t, b1_r, w2_t, b2_r)

    # Slice the lane padding back off.
    return out_p[:, :num_classes], fv_p[:, :hidden]


def init_params(key, in_size, hidden_size, num_classes, dtype=jnp.float32):
    """Deterministic PyTorch-style (Kaiming-uniform-ish) init, PyTorch layout."""
    k1, k2, k3, k4 = jax.random.split(key, 4)
    bound1 = 1.0 / jnp.sqrt(in_size)
    bound2 = 1.0 / jnp.sqrt(hidden_size)
    w1 = jax.random.uniform(k1, (hidden_size, in_size), dtype, -bound1, bound1)
    b1 = jax.random.uniform(k2, (hidden_size,), dtype, -bound1, bound1)
    w2 = jax.random.uniform(k3, (num_classes, hidden_size), dtype, -bound2, bound2)
    b2 = jax.random.uniform(k4, (num_classes,), dtype, -bound2, bound2)
    return w1, b1, w2, b2


if __name__ == "__main__":
    key = jax.random.PRNGKey(0)
    kx, kp = jax.random.split(key)

    # Small but non-trivial batch so the batch grid has >1 step.
    B, in_size, hidden_size, num_classes = 256, 32, 64, 16
    x = jax.random.normal(kx, (B, in_size), jnp.float32)
    w1, b1, w2, b2 = init_params(kp, in_size, hidden_size, num_classes)

    # Pure-JAX reference (PyTorch layout).
    fv_ref = x @ w1.T + b1
    out_ref = jnp.maximum(fv_ref, 0.0) @ w2.T + b2

    # --- f32 path: prepare (transpose / pad) weights ONCE, run the kernel. ---
    w1_t, b1_r, w2_t, b2_r, hid, ncls = prepare_params(w1, b1, w2, b2)
    out, fv = mlp_forward(x, w1_t, b1_r, w2_t, b2_r,
                          hidden=hid, num_classes=ncls, block_b=128)
    jax.block_until_ready((out, fv))
    assert out.shape == (B, num_classes) and fv.shape == (B, hidden_size)
    assert jnp.allclose(fv, fv_ref, atol=1e-4, rtol=1e-5), "fv mismatch (f32)"
    assert jnp.allclose(out, out_ref, atol=1e-4, rtol=1e-5), "out mismatch (f32)"

    # --- bf16 MXU path (f32 accumulation), fv stored in bf16. ---
    w1_b, b1_b, w2_b, b2_b, hid_b, ncls_b = prepare_params(
        w1, b1, w2, b2, compute_dtype=jnp.bfloat16)
    out_bf, fv_bf = mlp_forward(x, w1_b, b1_b, w2_b, b2_b,
                                hidden=hid_b, num_classes=ncls_b, block_b=128,
                                compute_dtype=jnp.bfloat16,
                                fv_dtype=jnp.bfloat16)
    jax.block_until_ready((out_bf, fv_bf))
    assert jnp.allclose(fv_bf.astype(jnp.float32), fv_ref,
                        atol=5e-2, rtol=5e-2), "fv mismatch (bf16)"
    assert jnp.allclose(out_bf.astype(jnp.float32), out_ref,
                        atol=5e-2, rtol=5e-2), "out mismatch (bf16)"

    print("KERNEL_OK")
</pallas_src>

<mosaic_0001>
module attributes {stable_mosaic.version = 11 : i64} {
  func.func @_mlp_kernel(%arg0: i32, %arg1: memref<128x32xf32, #tpu.memory_space<vmem>>, %arg2: memref<32x128xf32, #tpu.memory_space<vmem>>, %arg3: memref<1x128xf32, #tpu.memory_space<vmem>>, %arg4: memref<128x128xf32, #tpu.memory_space<vmem>>, %arg5: memref<1x128xf32, #tpu.memory_space<vmem>>, %arg6: memref<128x128xf32, #tpu.memory_space<vmem>>, %arg7: memref<128x128xf32, #tpu.memory_space<vmem>>) attributes {dimension_semantics = [#tpu.dimension_semantics<parallel>], iteration_bounds = array<i64: 2>, scalar_prefetch = 0 : i64, scratch_operands = 0 : i64, tpu.core_type = #tpu.core_type<tc>, window_params = [{transform_indices = @transform_0, window_bounds = array<i64: 128, 32>}, {pipeline_mode = #tpu.pipeline_mode<synchronous>, transform_indices = @transform_1, window_bounds = array<i64: 32, 128>}, {pipeline_mode = #tpu.pipeline_mode<synchronous>, transform_indices = @transform_2, window_bounds = array<i64: 1, 128>}, {pipeline_mode = #tpu.pipeline_mode<synchronous>, transform_indices = @transform_3, window_bounds = array<i64: 128, 128>}, {pipeline_mode = #tpu.pipeline_mode<synchronous>, transform_indices = @transform_4, window_bounds = array<i64: 1, 128>}, {transform_indices = @transform_5, window_bounds = array<i64: 128, 128>}, {transform_indices = @transform_6, window_bounds = array<i64: 128, 128>}]} {
    %c0 = arith.constant 0 : index
    %c0_0 = arith.constant 0 : index
    %0 = vector.load %arg1[%c0, %c0_0] : memref<128x32xf32, #tpu.memory_space<vmem>>, vector<128x32xf32>
    %c0_1 = arith.constant 0 : index
    %c0_2 = arith.constant 0 : index
    %1 = vector.load %arg2[%c0_1, %c0_2] : memref<32x128xf32, #tpu.memory_space<vmem>>, vector<32x128xf32>
    %cst = arith.constant dense<0.000000e+00> : vector<128x128xf32>
    %2 = tpu.matmul %0, %1, %cst {dimension_numbers = #tpu.dot_dimension_numbers<[1], [0], [0], [1], [0, 0, 1, 1], [], []>} : vector<128x32xf32>, vector<32x128xf32>, vector<128x128xf32> -> vector<128x128xf32>
    %c0_3 = arith.constant 0 : index
    %c0_4 = arith.constant 0 : index
    %3 = vector.load %arg3[%c0_3, %c0_4] : memref<1x128xf32, #tpu.memory_space<vmem>>, vector<1x128xf32>
    %4 = vector.broadcast %3 : vector<1x128xf32> to vector<128x128xf32>
    %5 = arith.addf %2, %4 : vector<128x128xf32>
    %c0_5 = arith.constant 0 : index
    %c0_6 = arith.constant 0 : index
    %6 = vector.load %arg7[%c0_5, %c0_6] : memref<128x128xf32, #tpu.memory_space<vmem>>, vector<128x128xf32>
    tpu.vector_store %arg7[%c0_5, %c0_6], %5 {strides = array<i32>} : memref<128x128xf32, #tpu.memory_space<vmem>>, vector<128x128xf32>,
    %cst_7 = arith.constant 0.000000e+00 : f32
    %7 = vector.broadcast %cst_7 : f32 to vector<128x128xf32>
    %8 = arith.maximumf %5, %7 : vector<128x128xf32>
    %c0_8 = arith.constant 0 : index
    %c0_9 = arith.constant 0 : index
    %9 = vector.load %arg4[%c0_8, %c0_9] : memref<128x128xf32, #tpu.memory_space<vmem>>, vector<128x128xf32>
    %cst_10 = arith.constant dense<0.000000e+00> : vector<128x128xf32>
    %10 = tpu.matmul %8, %9, %cst_10 {dimension_numbers = #tpu.dot_dimension_numbers<[1], [0], [0], [1], [0, 0, 1, 1], [], []>} : vector<128x128xf32>, vector<128x128xf32>, vector<128x128xf32> -> vector<128x128xf32>
    %c0_11 = arith.constant 0 : index
    %c0_12 = arith.constant 0 : index
    %11 = vector.load %arg5[%c0_11, %c0_12] : memref<1x128xf32, #tpu.memory_space<vmem>>, vector<1x128xf32>
    %12 = vector.broadcast %11 : vector<1x128xf32> to vector<128x128xf32>
    %13 = arith.addf %10, %12 : vector<128x128xf32>
    %c0_13 = arith.constant 0 : index
    %c0_14 = arith.constant 0 : index
    %14 = vector.load %arg6[%c0_13, %c0_14] : memref<128x128xf32, #tpu.memory_space<vmem>>, vector<128x128xf32>
    tpu.vector_store %arg6[%c0_13, %c0_14], %13 {strides = array<i32>} : memref<128x128xf32, #tpu.memory_space<vmem>>, vector<128x128xf32>,
    return
  }
  func.func @transform_0(%arg0: i32) -> (i32, i32) {
    %c0_i32 = arith.constant 0 : i32
    %c0_i32_0 = arith.constant 0 : i32
    return %arg0, %c0_i32 : i32, i32
  }
  func.func @transform_1(%arg0: i32) -> (i32, i32) {
    %c0_i32 = arith.constant 0 : i32
    %c0_i32_0 = arith.constant 0 : i32
    %c0_i32_1 = arith.constant 0 : i32
    return %c0_i32, %c0_i32_0 : i32, i32
  }
  func.func @transform_2(%arg0: i32) -> (i32, i32) {
    %c0_i32 = arith.constant 0 : i32
    %c0_i32_0 = arith.constant 0 : i32
    %c0_i32_1 = arith.constant 0 : i32
    return %c0_i32, %c0_i32_0 : i32, i32
  }
  func.func @transform_3(%arg0: i32) -> (i32, i32) {
    %c0_i32 = arith.constant 0 : i32
    %c0_i32_0 = arith.constant 0 : i32
    %c0_i32_1 = arith.constant 0 : i32
    return %c0_i32, %c0_i32_0 : i32, i32
  }
  func.func @transform_4(%arg0: i32) -> (i32, i32) {
    %c0_i32 = arith.constant 0 : i32
    %c0_i32_0 = arith.constant 0 : i32
    %c0_i32_1 = arith.constant 0 : i32
    return %c0_i32, %c0_i32_0 : i32, i32
  }
  func.func @transform_5(%arg0: i32) -> (i32, i32) {
    %c0_i32 = arith.constant 0 : i32
    %c0_i32_0 = arith.constant 0 : i32
    return %arg0, %c0_i32 : i32, i32
  }
  func.func @transform_6(%arg0: i32) -> (i32, i32) {
    %c0_i32 = arith.constant 0 : i32
    %c0_i32_0 = arith.constant 0 : i32
    return %arg0, %c0_i32 : i32, i32
  }
}

</mosaic_0001>

<llo_original>
// kernel: mlp_forward.1
$region0: #{mlp_forward.1}
  #allocation0 [shape = 'u32[]', space=smem, size = 0x4, offset = 0x4, fixed_abs, tag = 'smem constant byte address 0x4 - core index']
  #allocation1 [shape = 'u32[144,128]{1,0:T(1,128)}', space=vmem, size = 0x12000, scoped, tag = 'internal scratch']
  %s0 = inlined_call_operand.vmem [shape: f32[256,32], index: 0, kind: input, shape index: {}]
  %s1 = inlined_call_operand.vmem [shape: f32[32,128], index: 1, kind: input, shape index: {}]
  %s2 = inlined_call_operand.vmem [shape: f32[1,128], index: 2, kind: input, shape index: {}]
  %s3 = inlined_call_operand.vmem [shape: f32[128,128], index: 3, kind: input, shape index: {}]
  %s4 = inlined_call_operand.vmem [shape: f32[1,128], index: 4, kind: input, shape index: {}]
  %s5 = inlined_call_operand.vmem [shape: f32[256,128], index: 5, kind: output, shape index: {0}]
  %s6 = inlined_call_operand.vmem [shape: f32[256,128], index: 6, kind: output, shape index: {1}]
  %7 = xla_tuple %s5, %s6
  %s8 = sld [smem:[#allocation0]]
  $region61: #{mlp_forward.1} parent=0
    _
  %s10 = ssub.s32 1, %s8
  %s11 = scalar_select 0, %s10, %s8
  loop: start=0, step=1, limit=4
  $region2: #{mlp_forward.1} parent=0 // loop_pre_header
    _
  $region3: #{mlp_forward.1} parent=0 // loop_header
    %s13 = sphi 0, %s17
    %p14 = scmp.ge.s32.totalorder %s13, 4
    %s23 = sphi 0, %s25
    %s26 = sphi 0, %s23
    %s27 = sphi 0, %s26
    %s43 = sphi 0, %s27
    %s47 = sphi 0, %s47
    %s49 = sphi 0, %s47
    %s50 = sphi 0, %s49
    %s64 = sphi 0, %s50
    %s68 = sphi 0, %s68
    %s70 = sphi 0, %s68
    %s71 = sphi 0, %s70
    %s85 = sphi 0, %s71
    %s89 = sphi 0, %s89
    %s91 = sphi 0, %s89
    %s92 = sphi 0, %s91
    %s106 = sphi 0, %s92
    %s110 = sphi 0, %s110
    %s112 = sphi 0, %s110
    %s113 = sphi 0, %s112
    %s127 = sphi 0, %s113
    %s133 = sphi 0, %s135
    %s136 = sphi 0, %s133
    %s137 = sphi 0, %s136
    %s153 = sphi 0, %s137
    %s159 = sphi 0, %s161
    %s162 = sphi 0, %s159
    %s163 = sphi 0, %s162
    %s179 = sphi 0, %s163
  $region4: #{mlp_forward.1} parent=0 // loop_header_branch
    %16 = sbr.rel (%p14) target = $region8
  $region5: #{mlp_forward.1} parent=0 // loop_body
    %s18 = ssub.s32 %s13, 1
    %s19 = ssub.s32 %s13, 2
    %s20 = sadd.s32 %s13, 1
    %s21 = ssub.s32 %s13, %s20
    %p22 = scmp.eq.s32.totalorder %s21, 0
    %s24 = sadd.s32 %s23, 1
    %s25 = scalar_select %p22, %s23, %s24
    %p28 = pneg %p22
    %p29 = scmp.eq.s32.totalorder %s13, 1
    %p30 = por %p28, %p29
    %p31 = scmp.ne.s32.totalorder %s23, %s26
    %p32 = scmp.eq.s32.totalorder %s13, 0
    %p33 = por %p31, %p32
    %p34 = scmp.ne.s32.totalorder %s23, %s26
    %p35 = scmp.eq.s32.totalorder %s18, 1
    %p36 = por %p34, %p35
    %p37 = scmp.ne.s32.totalorder %s26, %s27
    %p38 = scmp.eq.s32.totalorder %s18, 0
    %p39 = por %p37, %p38
    %p40 = scmp.ne.s32.totalorder %s26, %s27
    %p41 = scmp.eq.s32.totalorder %s19, 1
    %p42 = por %p40, %p41
    %p44 = scmp.ne.s32.totalorder %s27, %s43
    %p45 = scmp.eq.s32.totalorder %s19, 0
    %p46 = por %p44, %p45
    %s48 = sadd.s32 %s47, 1
    %p51 = scmp.eq.s32.totalorder %s13, 1
    %p52 = scmp.ne.s32.totalorder %s47, %s49
    %p53 = scmp.eq.s32.totalorder %s13, 0
    %p54 = por %p52, %p53
    %p55 = scmp.ne.s32.totalorder %s47, %s49
    %p56 = scmp.eq.s32.totalorder %s18, 1
    %p57 = por %p55, %p56
    %p58 = scmp.ne.s32.totalorder %s49, %s50
    %p59 = scmp.eq.s32.totalorder %s18, 0
    %p60 = por %p58, %p59
    %p61 = scmp.ne.s32.totalorder %s49, %s50
    %p62 = scmp.eq.s32.totalorder %s19, 1
    %p63 = por %p61, %p62
    %p65 = scmp.ne.s32.totalorder %s50, %s64
    %p66 = scmp.eq.s32.totalorder %s19, 0
    %p67 = por %p65, %p66
    %s69 = sadd.s32 %s68, 1
    %p72 = scmp.eq.s32.totalorder %s13, 1
    %p73 = scmp.ne.s32.totalorder %s68, %s70
    %p74 = scmp.eq.s32.totalorder %s13, 0
    %p75 = por %p73, %p74
    %p76 = scmp.ne.s32.totalorder %s68, %s70
    %p77 = scmp.eq.s32.totalorder %s18, 1
    %p78 = por %p76, %p77
    %p79 = scmp.ne.s32.totalorder %s70, %s71
    %p80 = scmp.eq.s32.totalorder %s18, 0
    %p81 = por %p79, %p80
    %p82 = scmp.ne.s32.totalorder %s70, %s71
    %p83 = scmp.eq.s32.totalorder %s19, 1
    %p84 = por %p82, %p83
    %p86 = scmp.ne.s32.totalorder %s71, %s85
    %p87 = scmp.eq.s32.totalorder %s19, 0
    %p88 = por %p86, %p87
    %s90 = sadd.s32 %s89, 1
    %p93 = scmp.eq.s32.totalorder %s13, 1
    %p94 = scmp.ne.s32.totalorder %s89, %s91
    %p95 = scmp.eq.s32.totalorder %s13, 0
    %p96 = por %p94, %p95
    %p97 = scmp.ne.s32.totalorder %s89, %s91
    %p98 = scmp.eq.s32.totalorder %s18, 1
    %p99 = por %p97, %p98
    %p100 = scmp.ne.s32.totalorder %s91, %s92
    %p101 = scmp.eq.s32.totalorder %s18, 0
    %p102 = por %p100, %p101
    %p103 = scmp.ne.s32.totalorder %s91, %s92
    %p104 = scmp.eq.s32.totalorder %s19, 1
    %p105 = por %p103, %p104
    %p107 = scmp.ne.s32.totalorder %s92, %s106
    %p108 = scmp.eq.s32.totalorder %s19, 0
    %p109 = por %p107, %p108
    %s111 = sadd.s32 %s110, 1
    %p114 = scmp.eq.s32.totalorder %s13, 1
    %p115 = scmp.ne.s32.totalorder %s110, %s112
    %p116 = scmp.eq.s32.totalorder %s13, 0
    %p117 = por %p115, %p116
    %p118 = scmp.ne.s32.totalorder %s110, %s112
    %p119 = scmp.eq.s32.totalorder %s18, 1
    %p120 = por %p118, %p119
    %p121 = scmp.ne.s32.totalorder %s112, %s113
    %p122 = scmp.eq.s32.totalorder %s18, 0
    %p123 = por %p121, %p122
    %p124 = scmp.ne.s32.totalorder %s112, %s113
    %p125 = scmp.eq.s32.totalorder %s19, 1
    %p126 = por %p124, %p125
    %p128 = scmp.ne.s32.totalorder %s113, %s127
    %p129 = scmp.eq.s32.totalorder %s19, 0
    %p130 = por %p128, %p129
    %s131 = ssub.s32 %s13, %s20
    %p132 = scmp.eq.s32.totalorder %s131, 0
    %s134 = sadd.s32 %s133, 1
    %s135 = scalar_select %p132, %s133, %s134
    %p138 = pneg %p132
    %p139 = scmp.eq.s32.totalorder %s13, 1
    %p140 = por %p138, %p139
    %p141 = scmp.ne.s32.totalorder %s133, %s136
    %p142 = scmp.eq.s32.totalorder %s13, 0
    %p143 = por %p141, %p142
    %p144 = scmp.ne.s32.totalorder %s133, %s136
    %p145 = scmp.eq.s32.totalorder %s18, 1
    %p146 = por %p144, %p145
    %p147 = scmp.ne.s32.totalorder %s136, %s137
    %p148 = scmp.eq.s32.totalorder %s18, 0
    %p149 = por %p147, %p148
    %p150 = scmp.ne.s32.totalorder %s136, %s137
    %p151 = scmp.eq.s32.totalorder %s19, 1
    %p152 = por %p150, %p151
    %p154 = scmp.ne.s32.totalorder %s137, %s153
    %p155 = scmp.eq.s32.totalorder %s19, 0
    %p156 = por %p154, %p155
    %s157 = ssub.s32 %s13, %s20
    %p158 = scmp.eq.s32.totalorder %s157, 0
    %s160 = sadd.s32 %s159, 1
    %s161 = scalar_select %p158, %s159, %s160
    %p164 = pneg %p158
    %p165 = scmp.eq.s32.totalorder %s13, 1
    %p166 = por %p164, %p165
    %p167 = scmp.ne.s32.totalorder %s159, %s162
    %p168 = scmp.eq.s32.totalorder %s13, 0
    %p169 = por %p167, %p168
    %p170 = scmp.ne.s32.totalorder %s159, %s162
    %p171 = scmp.eq.s32.totalorder %s18, 1
    %p172 = por %p170, %p171
    %p173 = scmp.ne.s32.totalorder %s162, %s163
    %p174 = scmp.eq.s32.totalorder %s18, 0
    %p175 = por %p173, %p174
    %p176 = scmp.ne.s32.totalorder %s162, %s163
    %p177 = scmp.eq.s32.totalorder %s19, 1
    %p178 = por %p176, %p177
    %p180 = scmp.ne.s32.totalorder %s163, %s179
    %p181 = scmp.eq.s32.totalorder %s19, 0
    %p182 = por %p180, %p181
    %p183 = scmp.le.s32.totalorder 1, %s13
    %p184 = scmp.lt.s32.totalorder %s13, 3
    %p185 = pnand %p183, %p184
    %p186 = pneg %p185
    // Predicated region
    $region9: #{mlp_forward.1} parent=5 // pred_check
      _
    $region10: #{mlp_forward.1} parent=5 // pred_check_branch
      %188 = sbr.rel (%p185) target = $region12
    $region11: #{mlp_forward.1} parent=5 // pred_region
      %s189 = ssub.s32 %s13, 1
      // Predicated region
      $region13: #{mlp_forward.1} parent=11 // pred_check
        %p190 = pneg %p60
      $region14: #{mlp_forward.1} parent=11 // pred_check_branch
        %192 = sbr.rel (%p190) target = $region16
      $region15: #{mlp_forward.1} parent=11 // pred_region
        _
      $region16: #{mlp_forward.1} parent=11 // pred_fallthru
        _
      // Predicated region
      $region17: #{mlp_forward.1} parent=11 // pred_check
        %p193 = pneg %p81
      $region18: #{mlp_forward.1} parent=11 // pred_check_branch
        %195 = sbr.rel (%p193) target = $region20
      $region19: #{mlp_forward.1} parent=11 // pred_region
        _
      $region20: #{mlp_forward.1} parent=11 // pred_fallthru
        _
      // Predicated region
      $region21: #{mlp_forward.1} parent=11 // pred_check
        %p196 = pneg %p102
      $region22: #{mlp_forward.1} parent=11 // pred_check_branch
        %198 = sbr.rel (%p196) target = $region24
      $region23: #{mlp_forward.1} parent=11 // pred_region
        _
      $region24: #{mlp_forward.1} parent=11 // pred_fallthru
        _
      // Predicated region
      $region25: #{mlp_forward.1} parent=11 // pred_check
        %p199 = pneg %p123
      $region26: #{mlp_forward.1} parent=11 // pred_check_branch
        %201 = sbr.rel (%p199) target = $region28
      $region27: #{mlp_forward.1} parent=11 // pred_region
        _
      $region28: #{mlp_forward.1} parent=11 // pred_fallthru
        _
    $region12: #{mlp_forward.1} parent=5 // pred_fallthru
      _
    %p202 = scmp.lt.s32.totalorder %s13, 2
    // Predicated region
    $region29: #{mlp_forward.1} parent=5 // pred_check
      %p203 = pneg %p202
    $region30: #{mlp_forward.1} parent=5 // pred_check_branch
      %205 = sbr.rel (%p203) target = $region32
    $region31: #{mlp_forward.1} parent=5 // pred_region
      // Predicated region
      $region33: #{mlp_forward.1} parent=31 // pred_check
        %p206 = pneg %p33
      $region34: #{mlp_forward.1} parent=31 // pred_check_branch
        %208 = sbr.rel (%p206) target = $region36
      $region35: #{mlp_forward.1} parent=31 // pred_region
        %s209 = smul.u32 16, %s13
        %p210 = scmp.lt.s32.totalorder %s209, 31
        %s211 = scalar_select %p210, %s209, 31
        %s212 = smul.addr %s211, 8
        %s213 = scalar_lea.vmem %s0, %s212
        %s214 = smul.u32 16, %s13
      $region36: #{mlp_forward.1} parent=31 // pred_fallthru
        _
    $region32: #{mlp_forward.1} parent=5 // pred_fallthru
      _
    %p215 = scmp.le.s32.totalorder 1, %s13
    %p216 = scmp.lt.s32.totalorder %s13, 3
    %p217 = pnand %p215, %p216
    %p218 = pneg %p217
    // Predicated region
    $region37: #{mlp_forward.1} parent=5 // pred_check
      _
    $region38: #{mlp_forward.1} parent=5 // pred_check_branch
      %220 = sbr.rel (%p217) target = $region40
    $region39: #{mlp_forward.1} parent=5 // pred_region
      %s221 = ssub.s32 %s13, 1
      %s222 = smul.u32 16, %s18
      %p223 = scmp.lt.s32.totalorder %s222, 31
      %s224 = scalar_select %p223, %s222, 31
      %s225 = smul.addr %s224, 8
      %s226 = scalar_lea.vmem %s0, %s225
      %p227 = pneg %p39
      %p228 = pneg %p36
      %p229 = pneg %p60
      %p230 = pneg %p57
      %p231 = pneg %p81
      %p232 = pneg %p78
      %p233 = pneg %p102
      %p234 = pneg %p99
      %p235 = pneg %p123
      %p236 = pneg %p120
      %p237 = pneg %p149
      %p238 = pneg %p146
      %s239 = smul.u32 16, %s18
      %p240 = scmp.lt.s32.totalorder %s239, 31
      %s241 = scalar_select %p240, %s239, 31
      %s242 = smul.addr %s241, 8
      %s243 = scalar_lea.vmem %s5, %s242
      %p244 = pneg %p175
      %p245 = pneg %p172
      %s246 = smul.u32 16, %s18
      %p247 = scmp.lt.s32.totalorder %s246, 31
      %s248 = scalar_select %p247, %s246, 31
      %s249 = smul.addr %s248, 8
      %s250 = scalar_lea.vmem %s6, %s249
      %s251 = smul.u32 16, %s18
      %p252 = scmp.lt.s32.totalorder %s251, 31
      %s253 = scalar_select %p252, %s251, 31
      %s254 = smul.addr %s253, 8
      %s255 = scalar_lea.vmem %s0, %s254
      %s256 = smul.u32 16, %s18
      %s257 = smul.u32 16, %s18
      %p258 = scmp.lt.s32.totalorder %s257, 31
      %s259 = scalar_select %p258, %s257, 31
      %s260 = smul.addr %s259, 8
      %s261 = scalar_lea.vmem %s5, %s260
      %s262 = smul.u32 16, %s18
      %s263 = smul.u32 16, %s18
      %p264 = scmp.lt.s32.totalorder %s263, 31
      %s265 = scalar_select %p264, %s263, 31
      %s266 = smul.addr %s265, 8
      %s267 = scalar_lea.vmem %s6, %s266
      %s268 = smul.u32 16, %s18
      %v269 = vld [vmem:[%s255] sm:$0xff]
      %v270 = vld [vmem:[%s255 + $0x8] sm:$0xff]
      %v271 = vld [vmem:[%s255 + $0x10] sm:$0xff]
      %v272 = vld [vmem:[%s255 + $0x18] sm:$0xff]
      %v273 = vld [vmem:[%s255 + $0x20] sm:$0xff]
      %v274 = vld [vmem:[%s255 + $0x28] sm:$0xff]
      %v275 = vld [vmem:[%s255 + $0x30] sm:$0xff]
      %v276 = vld [vmem:[%s255 + $0x38] sm:$0xff]
      %v277 = vld [vmem:[%s255 + $0x40] sm:$0xff]
      %v278 = vld [vmem:[%s255 + $0x48] sm:$0xff]
      %v279 = vld [vmem:[%s255 + $0x50] sm:$0xff]
      %v280 = vld [vmem:[%s255 + $0x58] sm:$0xff]
      %v281 = vld [vmem:[%s255 + $0x60] sm:$0xff]
      %v282 = vld [vmem:[%s255 + $0x68] sm:$0xff]
      %v283 = vld [vmem:[%s255 + $0x70] sm:$0xff]
      %v284 = vld [vmem:[%s255 + $0x78] sm:$0xff]
      %v285 = vld [vmem:[%s1] sm:$0xff]
      %v286 = vld [vmem:[%s1 + $0x8] sm:$0xff]
      %v287 = vld [vmem:[%s1 + $0x10] sm:$0xff]
      %v288 = vld [vmem:[%s1 + $0x18] sm:$0xff]
      %v289 = vld [vmem:[%s2] sm:$0x1]
      %v291 = vlaneseq
      %v292 = vshrl.u32 %v291, 7
      %v293 = vsub.s32 0, %v292
      %v294 = vrot.slane %v289, %v293
      %vm296 = vcmask 261120
      %v298 = vsel %vm296, %v269, 0
      %v301 = vsel %vm296, %v270, 0
      %v304 = vsel %vm296, %v271, 0
      %v307 = vsel %vm296, %v272, 0
      %v310 = vsel %vm296, %v273, 0
      %v313 = vsel %vm296, %v274, 0
      %v316 = vsel %vm296, %v275, 0
      %v319 = vsel %vm296, %v276, 0
      %v322 = vsel %vm296, %v277, 0
      %v325 = vsel %vm296, %v278, 0
      %v328 = vsel %vm296, %v279, 0
      %v331 = vsel %vm296, %v280, 0
      %v334 = vsel %vm296, %v281, 0
      %v337 = vsel %vm296, %v282, 0
      %v340 = vsel %vm296, %v283, 0
      %v343 = vsel %vm296, %v284, 0
      %345 = vmatprep.subr.mxu0 0.0
      %346 = vmatpush1.msra.mxu0 %v285
      %347 = vmatprep.subr.mxu0 0.0
      %348 = vmatpush1.msra.mxu0 %v286
      %349 = vmatprep.subr.mxu0 0.0
      %350 = vmatpush1.msra.mxu0 %v287
      %351 = vmatprep.subr.mxu0 0.0
      %352 = vmatpush1.msra.mxu0 %v288
      %353 = vmatprep.subr.mxu0 0.0
      %354 = vmatpush1.msra.mxu0 0.0
      %355 = vmatprep.subr.mxu0 0.0
      %356 = vmatpush1.msra.mxu0 0.0
      %357 = vmatprep.subr.mxu0 0.0
      %358 = vmatpush1.msra.mxu0 0.0
      %359 = vmatprep.subr.mxu0 0.0
      %360 = vmatpush1.msra.mxu0 0.0
      %361 = vmatprep.subr.mxu0 0.0
      %362 = vmatpush1.msra.mxu0 0.0
      %363 = vmatprep.subr.mxu0 0.0
      %364 = vmatpush1.msra.mxu0 0.0
      %365 = vmatprep.subr.mxu0 0.0
      %366 = vmatpush1.msra.mxu0 0.0
      %367 = vmatprep.subr.mxu0 0.0
      %368 = vmatpush1.msra.mxu0 0.0
      %369 = vmatprep.subr.mxu0 0.0
      %370 = vmatpush1.msra.mxu0 0.0
      %371 = vmatprep.subr.mxu0 0.0
      %372 = vmatpush1.msra.mxu0 0.0
      %373 = vmatprep.subr.mxu0 0.0
      %374 = vmatpush1.msra.mxu0 0.0
      %375 = vmatprep.subr.mxu0 0.0
      %376 = vmatpush1.msra.mxu0 0.0
      %377 = vmatprep.subr.mxu0 0.0
      %378 = vmatpush1.msra.mxu0 0.0
      %379 = vmatprep.subr.mxu0 0.0
      %380 = vmatpush1.msra.mxu0 0.0
      %381 = vmatprep.subr.mxu0 0.0
      %382 = vmatpush1.msra.mxu0 0.0
      %383 = vmatprep.subr.mxu0 0.0
      %384 = vmatpush1.msra.mxu0 0.0
      %385 = vmatprep.subr.mxu0 0.0
      %386 = vmatpush1.msra.mxu0 0.0
      %387 = vmatprep.subr.mxu0 0.0
      %388 = vmatpush1.msra.mxu0 0.0
      %389 = vmatprep.subr.mxu0 0.0
      %390 = vmatpush1.msra.mxu0 0.0
      %391 = vmatprep.subr.mxu0 0.0
      %392 = vmatpush1.msra.mxu0 0.0
      %393 = vmatprep.subr.mxu0 0.0
      %394 = vmatpush1.msra.mxu0 0.0
      %395 = vmatprep.subr.mxu0 0.0
      %396 = vmatpush1.msra.mxu0 0.0
      %397 = vmatprep.subr.mxu0 0.0
      %398 = vmatpush1.msra.mxu0 0.0
      %399 = vmatprep.subr.mxu0 0.0
      %400 = vmatpush1.msra.mxu0 0.0
      %401 = vmatprep.subr.mxu0 0.0
      %402 = vmatpush1.msra.mxu0 0.0
      %403 = vmatprep.subr.mxu0 0.0
      %404 = vmatpush1.msra.mxu0 0.0
      %405 = vmatprep.subr.mxu0 0.0
      %406 = vmatpush1.msra.mxu0 0.0
      %407 = vmatprep.subr.mxu0 0.0
      %408 = vmatpush1.msra.mxu0 0.0
      %409 = vmatprep.mubr.f32.mxu0 0.0
      %410 = vmatmul.mubr.f32.gmra.mrb[0].mxu0 %v298
      %v411 = vpop.f32.mrb[0].mxu0
      %v412 = vadd.f32 %v294, %v411
      %v413 = vpop.f32.mrb[0].mxu0
      %414 = vmatprep.mubr.f32.mxu0 0.0
      %415 = vmatmul.mubr.f32.gmra.mrb[0].mxu0 %v301
      %v416 = vpop.f32.mrb[0].mxu0
      %v417 = vadd.f32 %v294, %v416
      %v418 = vpop.f32.mrb[0].mxu0
      %419 = vmatprep.mubr.f32.mxu0 0.0
      %420 = vmatmul.mubr.f32.gmra.mrb[0].mxu0 %v304
      %v421 = vpop.f32.mrb[0].mxu0
      %v422 = vadd.f32 %v294, %v421
      %v423 = vpop.f32.mrb[0].mxu0
      %424 = vmatprep.mubr.f32.mxu0 0.0
      %425 = vmatmul.mubr.f32.gmra.mrb[0].mxu0 %v307
      %v426 = vpop.f32.mrb[0].mxu0
      %v427 = vadd.f32 %v294, %v426
      %v428 = vpop.f32.mrb[0].mxu0
      %429 = vmatprep.mubr.f32.mxu0 0.0
      %430 = vmatmul.mubr.f32.gmra.mrb[0].mxu0 %v310
      %v431 = vpop.f32.mrb[0].mxu0
      %v432 = vadd.f32 %v294, %v431
      %v433 = vpop.f32.mrb[0].mxu0
      %434 = vmatprep.mubr.f32.mxu0 0.0
      %435 = vmatmul.mubr.f32.gmra.mrb[0].mxu0 %v313
      %v436 = vpop.f32.mrb[0].mxu0
      %v437 = vadd.f32 %v294, %v436
      %v438 = vpop.f32.mrb[0].mxu0
      %439 = vmatprep.mubr.f32.mxu0 0.0
      %440 = vmatmul.mubr.f32.gmra.mrb[0].mxu0 %v316
      %v441 = vpop.f32.mrb[0].mxu0
      %v442 = vadd.f32 %v294, %v441
      %v443 = vpop.f32.mrb[0].mxu0
      %444 = vmatprep.mubr.f32.mxu0 0.0
      %445 = vmatmul.mubr.f32.gmra.mrb[0].mxu0 %v319
      %v446 = vpop.f32.mrb[0].mxu0
      %v447 = vadd.f32 %v294, %v446
      %v448 = vpop.f32.mrb[0].mxu0
      %449 = vmatprep.mubr.f32.mxu0 0.0
      %450 = vmatmul.mubr.f32.gmra.mrb[0].mxu0 %v322
      %v451 = vpop.f32.mrb[0].mxu0
      %v452 = vadd.f32 %v294, %v451
      %v453 = vpop.f32.mrb[0].mxu0
      %454 = vmatprep.mubr.f32.mxu0 0.0
      %455 = vmatmul.mubr.f32.gmra.mrb[0].mxu0 %v325
      %v456 = vpop.f32.mrb[0].mxu0
      %v457 = vadd.f32 %v294, %v456
      %v458 = vpop.f32.mrb[0].mxu0
      %459 = vmatprep.mubr.f32.mxu0 0.0
      %460 = vmatmul.mubr.f32.gmra.mrb[0].mxu0 %v328
      %v461 = vpop.f32.mrb[0].mxu0
      %v462 = vadd.f32 %v294, %v461
      %v463 = vpop.f32.mrb[0].mxu0
      %464 = vmatprep.mubr.f32.mxu0 0.0
      %465 = vmatmul.mubr.f32.gmra.mrb[0].mxu0 %v331
      %v466 = vpop.f32.mrb[0].mxu0
      %v467 = vadd.f32 %v294, %v466
      %v468 = vpop.f32.mrb[0].mxu0
      %469 = vmatprep.mubr.f32.mxu0 0.0
      %470 = vmatmul.mubr.f32.gmra.mrb[0].mxu0 %v334
      %v471 = vpop.f32.mrb[0].mxu0
      %v472 = vadd.f32 %v294, %v471
      %v473 = vpop.f32.mrb[0].mxu0
      %474 = vmatprep.mubr.f32.mxu0 0.0
      %475 = vmatmul.mubr.f32.gmra.mrb[0].mxu0 %v337
      %v476 = vpop.f32.mrb[0].mxu0
      %v477 = vadd.f32 %v294, %v476
      %v478 = vpop.f32.mrb[0].mxu0
      %479 = vmatprep.mubr.f32.mxu0 0.0
      %480 = vmatmul.mubr.f32.gmra.mrb[0].mxu0 %v340
      %v481 = vpop.f32.mrb[0].mxu0
      %v482 = vadd.f32 %v294, %v481
      %v483 = vpop.f32.mrb[0].mxu0
      %484 = vmatprep.mubr.f32.mxu0 0.0
      %485 = vmatmul.mubr.f32.gmra.mrb[0].mxu0 %v343
      %v486 = vpop.f32.mrb[0].mxu0
      %v487 = vadd.f32 %v294, %v486
      %v488 = vpop.f32.mrb[0].mxu0
      %489 = vdwg.mxu0
      %490 = vst [vmem:[%s267] sm:$0xff] %v412
      %491 = vst [vmem:[%s267 + $0x8] sm:$0xff] %v417
      %492 = vst [vmem:[%s267 + $0x10] sm:$0xff] %v422
      %493 = vst [vmem:[%s267 + $0x18] sm:$0xff] %v427
      %494 = vst [vmem:[%s267 + $0x20] sm:$0xff] %v432
      %495 = vst [vmem:[%s267 + $0x28] sm:$0xff] %v437
      %496 = vst [vmem:[%s267 + $0x30] sm:$0xff] %v442
      %497 = vst [vmem:[%s267 + $0x38] sm:$0xff] %v447
      %498 = vst [vmem:[%s267 + $0x40] sm:$0xff] %v452
      %499 = vst [vmem:[%s267 + $0x48] sm:$0xff] %v457
      %500 = vst [vmem:[%s267 + $0x50] sm:$0xff] %v462
      %501 = vst [vmem:[%s267 + $0x58] sm:$0xff] %v467
      %502 = vst [vmem:[%s267 + $0x60] sm:$0xff] %v472
      %503 = vst [vmem:[%s267 + $0x68] sm:$0xff] %v477
      %504 = vst [vmem:[%s267 + $0x70] sm:$0xff] %v482
      %505 = vst [vmem:[%s267 + $0x78] sm:$0xff] %v487
      %v506 = vmax.f32 %v412, 0.0
      %v507 = vmax.f32 %v417, 0.0
      %v508 = vmax.f32 %v422, 0.0
      %v509 = vmax.f32 %v427, 0.0
      %v510 = vmax.f32 %v432, 0.0
      %v511 = vmax.f32 %v437, 0.0
      %v512 = vmax.f32 %v442, 0.0
      %v513 = vmax.f32 %v447, 0.0
      %v514 = vmax.f32 %v452, 0.0
      %v515 = vmax.f32 %v457, 0.0
      %v516 = vmax.f32 %v462, 0.0
      %v517 = vmax.f32 %v467, 0.0
      %v518 = vmax.f32 %v472, 0.0
      %v519 = vmax.f32 %v477, 0.0
      %v520 = vmax.f32 %v482, 0.0
      %v521 = vmax.f32 %v487, 0.0
      %v522 = vld [vmem:[%s3] sm:$0xff]
      %v523 = vld [vmem:[%s3 + $0x8] sm:$0xff]
      %v524 = vld [vmem:[%s3 + $0x10] sm:$0xff]
      %v525 = vld [vmem:[%s3 + $0x18] sm:$0xff]
      %v526 = vld [vmem:[%s3 + $0x20] sm:$0xff]
      %v527 = vld [vmem:[%s3 + $0x28] sm:$0xff]
      %v528 = vld [vmem:[%s3 + $0x30] sm:$0xff]
      %v529 = vld [vmem:[%s3 + $0x38] sm:$0xff]
      %v530 = vld [vmem:[%s3 + $0x40] sm:$0xff]
      %v531 = vld [vmem:[%s3 + $0x48] sm:$0xff]
      %v532 = vld [vmem:[%s3 + $0x50] sm:$0xff]
      %v533 = vld [vmem:[%s3 + $0x58] sm:$0xff]
      %v534 = vld [vmem:[%s3 + $0x60] sm:$0xff]
      %v535 = vld [vmem:[%s3 + $0x68] sm:$0xff]
      %v536 = vld [vmem:[%s3 + $0x70] sm:$0xff]
      %v537 = vld [vmem:[%s3 + $0x78] sm:$0xff]
      %v538 = vld [vmem:[%s4] sm:$0x1]
      %v540 = vlaneseq
      %v541 = vshrl.u32 %v540, 7
      %v542 = vsub.s32 0, %v541
      %v543 = vrot.slane %v538, %v542
      %545 = vmatprep.subr.mxu0 0.0
      %546 = vmatpush1.msra.mxu0 %v522
      %547 = vmatprep.subr.mxu0 0.0
      %548 = vmatpush1.msra.mxu0 %v523
      %549 = vmatprep.subr.mxu0 0.0
      %550 = vmatpush1.msra.mxu0 %v524
      %551 = vmatprep.subr.mxu0 0.0
      %552 = vmatpush1.msra.mxu0 %v525
      %553 = vmatprep.subr.mxu0 0.0
      %554 = vmatpush1.msra.mxu0 %v526
      %555 = vmatprep.subr.mxu0 0.0
      %556 = vmatpush1.msra.mxu0 %v527
      %557 = vmatprep.subr.mxu0 0.0
      %558 = vmatpush1.msra.mxu0 %v528
      %559 = vmatprep.subr.mxu0 0.0
      %560 = vmatpush1.msra.mxu0 %v529
      %561 = vmatprep.subr.mxu0 0.0
      %562 = vmatpush1.msra.mxu0 %v530
      %563 = vmatprep.subr.mxu0 0.0
      %564 = vmatpush1.msra.mxu0 %v531
      %565 = vmatprep.subr.mxu0 0.0
      %566 = vmatpush1.msra.mxu0 %v532
      %567 = vmatprep.subr.mxu0 0.0
      %568 = vmatpush1.msra.mxu0 %v533
      %569 = vmatprep.subr.mxu0 0.0
      %570 = vmatpush1.msra.mxu0 %v534
      %571 = vmatprep.subr.mxu0 0.0
      %572 = vmatpush1.msra.mxu0 %v535
      %573 = vmatprep.subr.mxu0 0.0
      %574 = vmatpush1.msra.mxu0 %v536
      %575 = vmatprep.subr.mxu0 0.0
      %576 = vmatpush1.msra.mxu0 %v537
      %577 = vmatprep.subr.mxu0 0.0
      %578 = vmatpush1.msra.mxu0 0.0
      %579 = vmatprep.subr.mxu0 0.0
      %580 = vmatpush1.msra.mxu0 0.0
      %581 = vmatprep.subr.mxu0 0.0
      %582 = vmatpush1.msra.mxu0 0.0
      %583 = vmatprep.subr.mxu0 0.0
      %584 = vmatpush1.msra.mxu0 0.0
      %585 = vmatprep.subr.mxu0 0.0
      %586 = vmatpush1.msra.mxu0 0.0
      %587 = vmatprep.subr.mxu0 0.0
      %588 = vmatpush1.msra.mxu0 0.0
      %589 = vmatprep.subr.mxu0 0.0
      %590 = vmatpush1.msra.mxu0 0.0
      %591 = vmatprep.subr.mxu0 0.0
      %592 = vmatpush1.msra.mxu0 0.0
      %593 = vmatprep.subr.mxu0 0.0
      %594 = vmatpush1.msra.mxu0 0.0
      %595 = vmatprep.subr.mxu0 0.0
      %596 = vmatpush1.msra.mxu0 0.0
      %597 = vmatprep.subr.mxu0 0.0
      %598 = vmatpush1.msra.mxu0 0.0
      %599 = vmatprep.subr.mxu0 0.0
      %600 = vmatpush1.msra.mxu0 0.0
      %601 = vmatprep.subr.mxu0 0.0
      %602 = vmatpush1.msra.mxu0 0.0
      %603 = vmatprep.subr.mxu0 0.0
      %604 = vmatpush1.msra.mxu0 0.0
      %605 = vmatprep.subr.mxu0 0.0
      %606 = vmatpush1.msra.mxu0 0.0
      %607 = vmatprep.subr.mxu0 0.0
      %608 = vmatpush1.msra.mxu0 0.0
      %609 = vmatprep.mubr.f32.mxu0 0.0
      %610 = vmatmul.mubr.f32.gmra.mrb[0].mxu0 %v506
      %v611 = vpop.f32.mrb[0].mxu0
      %v612 = vadd.f32 %v543, %v611
      %v613 = vpop.f32.mrb[0].mxu0
      %614 = vmatprep.mubr.f32.mxu0 0.0
      %615 = vmatmul.mubr.f32.gmra.mrb[0].mxu0 %v507
      %v616 = vpop.f32.mrb[0].mxu0
      %v617 = vadd.f32 %v543, %v616
      %v618 = vpop.f32.mrb[0].mxu0
      %619 = vmatprep.mubr.f32.mxu0 0.0
      %620 = vmatmul.mubr.f32.gmra.mrb[0].mxu0 %v508
      %v621 = vpop.f32.mrb[0].mxu0
      %v622 = vadd.f32 %v543, %v621
      %v623 = vpop.f32.mrb[0].mxu0
      %624 = vmatprep.mubr.f32.mxu0 0.0
      %625 = vmatmul.mubr.f32.gmra.mrb[0].mxu0 %v509
      %v626 = vpop.f32.mrb[0].mxu0
      %v627 = vadd.f32 %v543, %v626
      %v628 = vpop.f32.mrb[0].mxu0
      %629 = vmatprep.mubr.f32.mxu0 0.0
      %630 = vmatmul.mubr.f32.gmra.mrb[0].mxu0 %v510
      %v631 = vpop.f32.mrb[0].mxu0
      %v632 = vadd.f32 %v543, %v631
      %v633 = vpop.f32.mrb[0].mxu0
      %634 = vmatprep.mubr.f32.mxu0 0.0
      %635 = vmatmul.mubr.f32.gmra.mrb[0].mxu0 %v511
      %v636 = vpop.f32.mrb[0].mxu0
      %v637 = vadd.f32 %v543, %v636
      %v638 = vpop.f32.mrb[0].mxu0
      %639 = vmatprep.mubr.f32.mxu0 0.0
      %640 = vmatmul.mubr.f32.gmra.mrb[0].mxu0 %v512
      %v641 = vpop.f32.mrb[0].mxu0
      %v642 = vadd.f32 %v543, %v641
      %v643 = vpop.f32.mrb[0].mxu0
      %644 = vmatprep.mubr.f32.mxu0 0.0
      %645 = vmatmul.mubr.f32.gmra.mrb[0].mxu0 %v513
      %v646 = vpop.f32.mrb[0].mxu0
      %v647 = vadd.f32 %v543, %v646
      %v648 = vpop.f32.mrb[0].mxu0
      %649 = vmatprep.mubr.f32.mxu0 0.0
      %650 = vmatmul.mubr.f32.gmra.mrb[0].mxu0 %v514
      %v651 = vpop.f32.mrb[0].mxu0
      %v652 = vadd.f32 %v543, %v651
      %v653 = vpop.f32.mrb[0].mxu0
      %654 = vmatprep.mubr.f32.mxu0 0.0
      %655 = vmatmul.mubr.f32.gmra.mrb[0].mxu0 %v515
      %v656 = vpop.f32.mrb[0].mxu0
      %v657 = vadd.f32 %v543, %v656
      %v658 = vpop.f32.mrb[0].mxu0
      %659 = vmatprep.mubr.f32.mxu0 0.0
      %660 = vmatmul.mubr.f32.gmra.mrb[0].mxu0 %v516
      %v661 = vpop.f32.mrb[0].mxu0
      %v662 = vadd.f32 %v543, %v661
      %v663 = vpop.f32.mrb[0].mxu0
      %664 = vmatprep.mubr.f32.mxu0 0.0
      %665 = vmatmul.mubr.f32.gmra.mrb[0].mxu0 %v517
      %v666 = vpop.f32.mrb[0].mxu0
      %v667 = vadd.f32 %v543, %v666
      %v668 = vpop.f32.mrb[0].mxu0
      %669 = vmatprep.mubr.f32.mxu0 0.0
      %670 = vmatmul.mubr.f32.gmra.mrb[0].mxu0 %v518
      %v671 = vpop.f32.mrb[0].mxu0
      %v672 = vadd.f32 %v543, %v671
      %v673 = vpop.f32.mrb[0].mxu0
      %674 = vmatprep.mubr.f32.mxu0 0.0
      %675 = vmatmul.mubr.f32.gmra.mrb[0].mxu0 %v519
      %v676 = vpop.f32.mrb[0].mxu0
      %v677 = vadd.f32 %v543, %v676
      %v678 = vpop.f32.mrb[0].mxu0
      %679 = vmatprep.mubr.f32.mxu0 0.0
      %680 = vmatmul.mubr.f32.gmra.mrb[0].mxu0 %v520
      %v681 = vpop.f32.mrb[0].mxu0
      %v682 = vadd.f32 %v543, %v681
      %v683 = vpop.f32.mrb[0].mxu0
      %684 = vmatprep.mubr.f32.mxu0 0.0
      %685 = vmatmul.mubr.f32.gmra.mrb[0].mxu0 %v521
      %v686 = vpop.f32.mrb[0].mxu0
      %v687 = vadd.f32 %v543, %v686
      %v688 = vpop.f32.mrb[0].mxu0
      %689 = vdwg.mxu0
      %690 = vst [vmem:[%s261] sm:$0xff] %v612
      %691 = vst [vmem:[%s261 + $0x8] sm:$0xff] %v617
      %692 = vst [vmem:[%s261 + $0x10] sm:$0xff] %v622
      %693 = vst [vmem:[%s261 + $0x18] sm:$0xff] %v627
      %694 = vst [vmem:[%s261 + $0x20] sm:$0xff] %v632
      %695 = vst [vmem:[%s261 + $0x28] sm:$0xff] %v637
      %696 = vst [vmem:[%s261 + $0x30] sm:$0xff] %v642
      %697 = vst [vmem:[%s261 + $0x38] sm:$0xff] %v647
      %698 = vst [vmem:[%s261 + $0x40] sm:$0xff] %v652
      %699 = vst [vmem:[%s261 + $0x48] sm:$0xff] %v657
      %700 = vst [vmem:[%s261 + $0x50] sm:$0xff] %v662
      %701 = vst [vmem:[%s261 + $0x58] sm:$0xff] %v667
      %702 = vst [vmem:[%s261 + $0x60] sm:$0xff] %v672
      %703 = vst [vmem:[%s261 + $0x68] sm:$0xff] %v677
      %704 = vst [vmem:[%s261 + $0x70] sm:$0xff] %v682
      %705 = vst [vmem:[%s261 + $0x78] sm:$0xff] %v687
      %s706 = smul.u32 16, %s18
      %p707 = scmp.lt.s32.totalorder %s706, 31
      %s708 = scalar_select %p707, %s706, 31
      %s709 = smul.addr %s708, 8
      %s710 = scalar_lea.vmem %s5, %s709
      %s711 = smul.u32 16, %s18
      %p712 = scmp.lt.s32.totalorder %s711, 31
      %s713 = scalar_select %p712, %s711, 31
      %s714 = smul.addr %s713, 8
      %s715 = scalar_lea.vmem %s6, %s714
      // Predicated region
      $region41: #{mlp_forward.1} parent=39 // pred_check
        %p716 = pneg %p146
      $region42: #{mlp_forward.1} parent=39 // pred_check_branch
        %718 = sbr.rel (%p716) target = $region44
      $region43: #{mlp_forward.1} parent=39 // pred_region
        %s719 = smul.u32 16, %s18
      $region44: #{mlp_forward.1} parent=39 // pred_fallthru
        _
      // Predicated region
      $region45: #{mlp_forward.1} parent=39 // pred_check
        %p720 = pneg %p172
      $region46: #{mlp_forward.1} parent=39 // pred_check_branch
        %722 = sbr.rel (%p720) target = $region48
      $region47: #{mlp_forward.1} parent=39 // pred_region
        %s723 = smul.u32 16, %s18
      $region48: #{mlp_forward.1} parent=39 // pred_fallthru
        _
    $region40: #{mlp_forward.1} parent=5 // pred_fallthru
      _
    %p724 = scmp.le.s32.totalorder 2, %s13
    // Predicated region
    $region49: #{mlp_forward.1} parent=5 // pred_check
      %p725 = pneg %p724
    $region50: #{mlp_forward.1} parent=5 // pred_check_branch
      %727 = sbr.rel (%p725) target = $region52
    $region51: #{mlp_forward.1} parent=5 // pred_region
      %s728 = ssub.s32 %s13, 2
      // Predicated region
      $region53: #{mlp_forward.1} parent=51 // pred_check
        %p729 = pneg %p152
      $region54: #{mlp_forward.1} parent=51 // pred_check_branch
        %731 = sbr.rel (%p729) target = $region56
      $region55: #{mlp_forward.1} parent=51 // pred_region
        %s732 = smul.u32 16, %s19
        %p733 = scmp.lt.s32.totalorder %s732, 31
        %s734 = scalar_select %p733, %s732, 31
        %s735 = smul.addr %s734, 8
        %s736 = scalar_lea.vmem %s5, %s735
      $region56: #{mlp_forward.1} parent=51 // pred_fallthru
        _
      // Predicated region
      $region57: #{mlp_forward.1} parent=51 // pred_check
        %p737 = pneg %p178
      $region58: #{mlp_forward.1} parent=51 // pred_check_branch
        %739 = sbr.rel (%p737) target = $region60
      $region59: #{mlp_forward.1} parent=51 // pred_region
        %s740 = smul.u32 16, %s19
        %p741 = scmp.lt.s32.totalorder %s740, 31
        %s742 = scalar_select %p741, %s740, 31
        %s743 = smul.addr %s742, 8
        %s744 = scalar_lea.vmem %s6, %s743
      $region60: #{mlp_forward.1} parent=51 // pred_fallthru
        _
    $region52: #{mlp_forward.1} parent=5 // pred_fallthru
      _
  $region6: #{mlp_forward.1} parent=0 // loop_footer
    %s17 = sadd.s32 1, %s13
  $region7: #{mlp_forward.1} parent=0 // loop_footer_branch
    %12 = sbr.rel target = $region3
  $region8: #{mlp_forward.1} parent=0 // loop_exit
    _

</llo_original>
